<compile_context>
chip_gen: v6e
topology: v6e:2x2x1
jax: 0.10.0
libtpu: 0.0.40
codegen_flags: <defaults>
</compile_context>

<pallas_src>
import functools

import jax
import jax.numpy as jnp
from jax.experimental import pallas as pl
from jax.experimental.pallas import tpu as pltpu


def _layernorm_kernel(x_ref, gb_ref, o_ref, *, d, eps):
    # x_ref: (TN, r, d_in) tile -- one LayerNorm sample per leading index, folded
    # into r sublane-rows. gb_ref: (2, r, d_in) = [gamma_row, beta_row] (f32).
    inv_d = jnp.float32(1.0 / d)
    inv_dm1 = jnp.float32(1.0 / max(d - 1, 1))

    # Pass 1: per-sample mean.
    x = x_ref[...].astype(jnp.float32)
    mean = jnp.sum(x, axis=(1, 2), keepdims=True) * inv_d

    # Pass 2: unbiased variance around the mean (two-pass avoids cancellation).
    xc = x_ref[...].astype(jnp.float32) - mean
    var = jnp.sum(xc * xc, axis=(1, 2), keepdims=True) * inv_dm1
    std = jnp.sqrt(jnp.maximum(var, jnp.float32(0.0)))

    # Exact reciprocal on TN per-sample scalars (accuracy win, negligible cost).
    inv = jnp.float32(1.0) / (std + jnp.float32(eps))

    g = gb_ref[0].astype(jnp.float32)  # (r, d_in)
    b = gb_ref[1].astype(jnp.float32)  # (r, d_in)

    # Epilogue: per-sample scalar multiply first, then per-channel affine; every
    # broadcast is rank-reducing, so no full-tile temporary is materialized.
    y = (x_ref[...].astype(jnp.float32) - mean) * inv
    o_ref[...] = (y * g + b).astype(o_ref.dtype)


def layer_norm_pallas(x, gamma, beta, eps=1e-5):
    """x: (N, C, H, W); gamma, beta: (C,). Returns (N, C, H, W)."""
    n, c, h, w = x.shape
    d = c * h * w

    # Fold each sample's D elements into r sublane-rows; prefer r that keeps the
    # last (lane) dim a multiple of 128 -> unmasked lane-dense stores.
    r = 1
    for cand in (8, 4, 2):
        if d % (cand * 128) == 0:
            r = cand
            break
    if r == 1:
        for cand in (8, 4, 2):
            if d % cand == 0:
                r = cand
                break
    d_in = d // r

    x3d = x.reshape(n, r, d_in)
    # Per-channel affine broadcast over H*W, folded identically to x (NCHW order),
    # merged into a single resident (2, r, d_in) f32 input.
    g_row = jnp.broadcast_to(gamma.reshape(c, 1), (c, h * w)).reshape(r, d_in)
    b_row = jnp.broadcast_to(beta.reshape(c, 1), (c, h * w)).reshape(r, d_in)
    gb = jnp.stack([g_row, b_row], axis=0).astype(jnp.float32)

    # Tile sizing: mem-bound kernel; ~2 MiB tiles already sit near the HBM
    # roofline on all generations. Also keep >= ~8 grid steps so double-buffering
    # overlaps DMA with compute and megacore sharding has work on v7x.
    # TODO(synk): assumes one sample's row (D*itemsize) fits in VMEM; huge D would
    # need a second "arbitrary" grid axis with scratch accumulators.
    itemsize = jnp.dtype(x.dtype).itemsize
    row_bytes = d * itemsize
    per_buf_budget = 2 * 1024 * 1024
    tn = max(1, per_buf_budget // row_bytes)
    tn = min(tn, max(1, pl.cdiv(n, 8)))
    tn = min(tn, n)
    grid = (pl.cdiv(n, tn),)

    # VMEM budget: double-buffered in/out tiles + double-buffered params +
    # ~3 fp32 tile-sized intermediates + headroom; capped at 32 MiB (v7x-safe).
    in_tile = tn * row_bytes
    f32_tile = tn * d * 4
    gb_bytes = 2 * d * 4
    vmem_limit = 2 * in_tile + 2 * in_tile + 2 * gb_bytes + 3 * f32_tile + (4 << 20)
    vmem_limit = int(min(max(vmem_limit, 16 << 20), 32 << 20))

    cost = pl.CostEstimate(
        flops=7 * n * d,
        transcendentals=n,
        bytes_accessed=2 * n * d * itemsize + 2 * d * 4,
    )

    out3d = pl.pallas_call(
        functools.partial(_layernorm_kernel, d=d, eps=eps),
        out_shape=jax.ShapeDtypeStruct((n, r, d_in), x.dtype),
        grid=grid,
        in_specs=[
            pl.BlockSpec((tn, r, d_in), lambda i: (i, 0, 0)),
            # gamma/beta stay resident: same block index every grid step.
            pl.BlockSpec((2, r, d_in), lambda i: (0, 0, 0)),
        ],
        out_specs=pl.BlockSpec((tn, r, d_in), lambda i: (i, 0, 0)),
        compiler_params=pltpu.CompilerParams(
            dimension_semantics=("parallel",),
            vmem_limit_bytes=vmem_limit,
        ),
        cost_estimate=cost,
    )(x3d, gb)
    return out3d.reshape(n, c, h, w)


def layer_norm_ref(x, gamma, beta, eps=1e-5):
    n = x.shape[0]
    xf = x.reshape(n, -1)
    mean = xf.mean(axis=1).reshape(n, 1, 1, 1)
    std = jnp.sqrt(
        ((xf - xf.mean(axis=1, keepdims=True)) ** 2).sum(axis=1) / (xf.shape[1] - 1)
    ).reshape(n, 1, 1, 1)
    y = (x - mean) / (std + eps)
    shape = (1, -1, 1, 1)
    return gamma.reshape(shape) * y + beta.reshape(shape)


if __name__ == "__main__":
    key = jax.random.PRNGKey(0)
    kx, kg = jax.random.split(key)

    N, C, H, W = 2, 4, 16, 16
    x = jax.random.normal(kx, (N, C, H, W), dtype=jnp.float32)
    # matches nn.Parameter(torch.Tensor(C).uniform_()) / torch.zeros(C)
    gamma = jax.random.uniform(kg, (C,), dtype=jnp.float32)
    beta = jnp.zeros((C,), dtype=jnp.float32)

    out = layer_norm_pallas(x, gamma, beta, eps=1e-5)
    out = jax.block_until_ready(out)

    ref = layer_norm_ref(x, gamma, beta, eps=1e-5)
    assert out.shape == (N, C, H, W)
    assert jnp.allclose(out, ref, atol=1e-4, rtol=1e-4), "mismatch vs reference"

    print("KERNEL_OK")
</pallas_src>

<mosaic_0001>
module attributes {stable_mosaic.version = 11 : i64} {
  func.func @_layernorm_kernel(%arg0: i32, %arg1: memref<1x8x128xf32, #tpu.memory_space<vmem>>, %arg2: memref<2x8x128xf32, #tpu.memory_space<vmem>>, %arg3: memref<1x8x128xf32, #tpu.memory_space<vmem>>) attributes {dimension_semantics = [#tpu.dimension_semantics<parallel>], iteration_bounds = array<i64: 2>, scalar_prefetch = 0 : i64, scratch_operands = 0 : i64, tpu.core_type = #tpu.core_type<tc>, window_params = [{transform_indices = @transform_0, window_bounds = array<i64: 1, 8, 128>}, {pipeline_mode = #tpu.pipeline_mode<synchronous>, transform_indices = @transform_1, window_bounds = array<i64: 2, 8, 128>}, {transform_indices = @transform_2, window_bounds = array<i64: 1, 8, 128>}]} {
    %c0 = arith.constant 0 : index
    %c0_0 = arith.constant 0 : index
    %c0_1 = arith.constant 0 : index
    %0 = vector.load %arg1[%c0, %c0_0, %c0_1] : memref<1x8x128xf32, #tpu.memory_space<vmem>>, vector<1x8x128xf32>
    %cst = arith.constant dense<0.000000e+00> : vector<1xf32>
    %1 = vector.multi_reduction <add>, %0, %cst [1, 2] : vector<1x8x128xf32> to vector<1xf32>
    %2 = vector.shape_cast %1 : vector<1xf32> to vector<1x1x1xf32>
    %cst_2 = arith.constant 9.765625E-4 : f32
    %3 = vector.broadcast %cst_2 : f32 to vector<1x1x1xf32>
    %4 = arith.mulf %2, %3 : vector<1x1x1xf32>
    %c0_3 = arith.constant 0 : index
    %c0_4 = arith.constant 0 : index
    %c0_5 = arith.constant 0 : index
    %5 = vector.load %arg1[%c0_3, %c0_4, %c0_5] : memref<1x8x128xf32, #tpu.memory_space<vmem>>, vector<1x8x128xf32>
    %6 = vector.broadcast %4 : vector<1x1x1xf32> to vector<1x8x128xf32>
    %7 = arith.subf %5, %6 : vector<1x8x128xf32>
    %8 = arith.mulf %7, %7 : vector<1x8x128xf32>
    %cst_6 = arith.constant dense<0.000000e+00> : vector<1xf32>
    %9 = vector.multi_reduction <add>, %8, %cst_6 [1, 2] : vector<1x8x128xf32> to vector<1xf32>
    %10 = vector.shape_cast %9 : vector<1xf32> to vector<1x1x1xf32>
    %cst_7 = arith.constant 9.77517105E-4 : f32
    %11 = vector.broadcast %cst_7 : f32 to vector<1x1x1xf32>
    %12 = arith.mulf %10, %11 : vector<1x1x1xf32>
    %cst_8 = arith.constant 0.000000e+00 : f32
    %13 = vector.broadcast %cst_8 : f32 to vector<1x1x1xf32>
    %14 = arith.maximumf %12, %13 : vector<1x1x1xf32>
    %15 = math.sqrt %14 : vector<1x1x1xf32>
    %cst_9 = arith.constant 9.99999974E-6 : f32
    %16 = vector.broadcast %cst_9 : f32 to vector<1x1x1xf32>
    %17 = arith.addf %15, %16 : vector<1x1x1xf32>
    %cst_10 = arith.constant 1.000000e+00 : f32
    %18 = vector.broadcast %cst_10 : f32 to vector<1x1x1xf32>
    %19 = arith.divf %18, %17 : vector<1x1x1xf32>
    %c0_11 = arith.constant 0 : index
    %c0_12 = arith.constant 0 : index
    %c0_13 = arith.constant 0 : index
    %20 = vector.load %arg2[%c0_11, %c0_12, %c0_13] : memref<2x8x128xf32, #tpu.memory_space<vmem>>, vector<1x8x128xf32>
    %21 = vector.shape_cast %20 : vector<1x8x128xf32> to vector<8x128xf32>
    %c1 = arith.constant 1 : index
    %c0_14 = arith.constant 0 : index
    %c0_15 = arith.constant 0 : index
    %22 = vector.load %arg2[%c1, %c0_14, %c0_15] : memref<2x8x128xf32, #tpu.memory_space<vmem>>, vector<1x8x128xf32>
    %23 = vector.shape_cast %22 : vector<1x8x128xf32> to vector<8x128xf32>
    %c0_16 = arith.constant 0 : index
    %c0_17 = arith.constant 0 : index
    %c0_18 = arith.constant 0 : index
    %24 = vector.load %arg1[%c0_16, %c0_17, %c0_18] : memref<1x8x128xf32, #tpu.memory_space<vmem>>, vector<1x8x128xf32>
    %25 = vector.broadcast %4 : vector<1x1x1xf32> to vector<1x8x128xf32>
    %26 = arith.subf %24, %25 : vector<1x8x128xf32>
    %27 = vector.broadcast %19 : vector<1x1x1xf32> to vector<1x8x128xf32>
    %28 = arith.mulf %26, %27 : vector<1x8x128xf32>
    %29 = vector.shape_cast %21 : vector<8x128xf32> to vector<1x8x128xf32>
    %30 = arith.mulf %28, %29 : vector<1x8x128xf32>
    %31 = vector.shape_cast %23 : vector<8x128xf32> to vector<1x8x128xf32>
    %32 = arith.addf %30, %31 : vector<1x8x128xf32>
    %c0_19 = arith.constant 0 : index
    %c0_20 = arith.constant 0 : index
    %c0_21 = arith.constant 0 : index
    %33 = vector.load %arg3[%c0_19, %c0_20, %c0_21] : memref<1x8x128xf32, #tpu.memory_space<vmem>>, vector<1x8x128xf32>
    tpu.vector_store %arg3[%c0_19, %c0_20, %c0_21], %32 {strides = array<i32>} : memref<1x8x128xf32, #tpu.memory_space<vmem>>, vector<1x8x128xf32>,
    return
  }
  func.func @transform_0(%arg0: i32) -> (i32, i32, i32) {
    %c0_i32 = arith.constant 0 : i32
    %c0_i32_0 = arith.constant 0 : i32
    %c0_i32_1 = arith.constant 0 : i32
    return %arg0, %c0_i32, %c0_i32_0 : i32, i32, i32
  }
  func.func @transform_1(%arg0: i32) -> (i32, i32, i32) {
    %c0_i32 = arith.constant 0 : i32
    %c0_i32_0 = arith.constant 0 : i32
    %c0_i32_1 = arith.constant 0 : i32
    %c0_i32_2 = arith.constant 0 : i32
    return %c0_i32, %c0_i32_0, %c0_i32_1 : i32, i32, i32
  }
  func.func @transform_2(%arg0: i32) -> (i32, i32, i32) {
    %c0_i32 = arith.constant 0 : i32
    %c0_i32_0 = arith.constant 0 : i32
    %c0_i32_1 = arith.constant 0 : i32
    return %arg0, %c0_i32, %c0_i32_0 : i32, i32, i32
  }
}

</mosaic_0001>

<llo_original>
// kernel: tpu_custom_call.1
$region0: #{tpu_custom_call.1}
  #allocation0 [shape = 'u32[]', space=smem, size = 0x4, offset = 0x4, fixed_abs, tag = 'smem constant byte address 0x4 - core index']
  #allocation1 [shape = 'u32[144,128]{1,0:T(1,128)}', space=vmem, size = 0x12000, scoped, tag = 'internal scratch']
  %s0 = inlined_call_operand.hbm [shape: f32[2,8,128], index: 0, kind: input, shape index: {}]
  %s1 = inlined_call_operand.hbm [shape: f32[2,8,128], index: 1, kind: input, shape index: {}]
  %s2 = inlined_call_operand.hbm [shape: f32[2,8,128], index: 2, kind: output, shape index: {}]
  %s3 = sld [smem:[#allocation0]]
  $region49: #{tpu_custom_call.1} parent=0
    _
  %s5 = ssub.s32 1, %s3
  %s6 = scalar_select 0, %s5, %s3
  $region1: #{tpu_custom_call.1} parent=0
    #allocation2 [shape = 'u8[8192]{0}', space=vmem, size = 0x2000, scoped, tag = 'input window, operand 0']
    #allocation3 [shape = 's32[2]{0}', space=sflag, size = 0x8, scoped, tag = 'scoped memory for tpu_custom_call.1']
    #allocation4 [shape = 's32[2]{0}', space=sflag, size = 0x8, scoped, tag = 'scoped memory for tpu_custom_call.1']
    #allocation5 [shape = 'u8[8192]{0}', space=vmem, size = 0x2000, scoped, tag = 'input window, operand 1, single buffered']
    #allocation6 [shape = 's32[1]{0}', space=sflag, size = 0x4, scoped, tag = 'scoped memory for tpu_custom_call.1']
    #allocation7 [shape = 'u8[8192]{0}', space=vmem, size = 0x2000, scoped, tag = 'output window, operand 0']
    %7 = vsyncpa [#allocation3], 0
    %s8 = scalar_lea.sflag [#allocation3], 1
    %9 = vsyncpa %s8, 0
    %10 = vsyncpa [#allocation6], 0
    %11 = vsyncpa [#allocation4], 0
    %s12 = scalar_lea.sflag [#allocation4], 1
    %13 = vsyncpa %s12, 0
    loop: start=0, step=1, limit=4
    $region2: #{tpu_custom_call.1} parent=1 // loop_pre_header
      _
    $region3: #{tpu_custom_call.1} parent=1 // loop_header
      %s15 = sphi 0, %s19
      %p16 = scmp.ge.s32.totalorder %s15, 4
      %s25 = sphi 0, %s27
      %s28 = sphi 0, %s25
      %s29 = sphi 0, %s28
      %s45 = sphi 0, %s29
      %s49 = sphi 0, %s49
      %s51 = sphi 0, %s49
      %s52 = sphi 0, %s51
      %s66 = sphi 0, %s52
      %s72 = sphi 0, %s74
      %s75 = sphi 0, %s72
      %s76 = sphi 0, %s75
      %s92 = sphi 0, %s76
    $region4: #{tpu_custom_call.1} parent=1 // loop_header_branch
      %18 = sbr.rel (%p16) target = $region8
    $region5: #{tpu_custom_call.1} parent=1 // loop_body
      %s20 = ssub.s32 %s15, 1
      %s21 = ssub.s32 %s15, 2
      %s22 = sadd.s32 %s15, 1
      %s23 = ssub.s32 %s15, %s22
      %p24 = scmp.eq.s32.totalorder %s23, 0
      %s26 = sadd.s32 %s25, 1
      %s27 = scalar_select %p24, %s25, %s26
      %p30 = pneg %p24
      %p31 = scmp.eq.s32.totalorder %s15, 1
      %p32 = por %p30, %p31
      %p33 = scmp.ne.s32.totalorder %s25, %s28
      %p34 = scmp.eq.s32.totalorder %s15, 0
      %p35 = por %p33, %p34
      %p36 = scmp.ne.s32.totalorder %s25, %s28
      %p37 = scmp.eq.s32.totalorder %s20, 1
      %p38 = por %p36, %p37
      %p39 = scmp.ne.s32.totalorder %s28, %s29
      %p40 = scmp.eq.s32.totalorder %s20, 0
      %p41 = por %p39, %p40
      %p42 = scmp.ne.s32.totalorder %s28, %s29
      %p43 = scmp.eq.s32.totalorder %s21, 1
      %p44 = por %p42, %p43
      %p46 = scmp.ne.s32.totalorder %s29, %s45
      %p47 = scmp.eq.s32.totalorder %s21, 0
      %p48 = por %p46, %p47
      %s50 = sadd.s32 %s49, 1
      %p53 = scmp.eq.s32.totalorder %s15, 1
      %p54 = scmp.ne.s32.totalorder %s49, %s51
      %p55 = scmp.eq.s32.totalorder %s15, 0
      %p56 = por %p54, %p55
      %p57 = scmp.ne.s32.totalorder %s49, %s51
      %p58 = scmp.eq.s32.totalorder %s20, 1
      %p59 = por %p57, %p58
      %p60 = scmp.ne.s32.totalorder %s51, %s52
      %p61 = scmp.eq.s32.totalorder %s20, 0
      %p62 = por %p60, %p61
      %p63 = scmp.ne.s32.totalorder %s51, %s52
      %p64 = scmp.eq.s32.totalorder %s21, 1
      %p65 = por %p63, %p64
      %p67 = scmp.ne.s32.totalorder %s52, %s66
      %p68 = scmp.eq.s32.totalorder %s21, 0
      %p69 = por %p67, %p68
      %s70 = ssub.s32 %s15, %s22
      %p71 = scmp.eq.s32.totalorder %s70, 0
      %s73 = sadd.s32 %s72, 1
      %s74 = scalar_select %p71, %s72, %s73
      %p77 = pneg %p71
      %p78 = scmp.eq.s32.totalorder %s15, 1
      %p79 = por %p77, %p78
      %p80 = scmp.ne.s32.totalorder %s72, %s75
      %p81 = scmp.eq.s32.totalorder %s15, 0
      %p82 = por %p80, %p81
      %p83 = scmp.ne.s32.totalorder %s72, %s75
      %p84 = scmp.eq.s32.totalorder %s20, 1
      %p85 = por %p83, %p84
      %p86 = scmp.ne.s32.totalorder %s75, %s76
      %p87 = scmp.eq.s32.totalorder %s20, 0
      %p88 = por %p86, %p87
      %p89 = scmp.ne.s32.totalorder %s75, %s76
      %p90 = scmp.eq.s32.totalorder %s21, 1
      %p91 = por %p89, %p90
      %p93 = scmp.ne.s32.totalorder %s76, %s92
      %p94 = scmp.eq.s32.totalorder %s21, 0
      %p95 = por %p93, %p94
      %p96 = scmp.le.s32.totalorder 1, %s15
      %p97 = scmp.lt.s32.totalorder %s15, 3
      %p98 = pnand %p96, %p97
      %p99 = pneg %p98
      // Predicated region
      $region9: #{tpu_custom_call.1} parent=5 // pred_check
        _
      $region10: #{tpu_custom_call.1} parent=5 // pred_check_branch
        %101 = sbr.rel (%p98) target = $region12
      $region11: #{tpu_custom_call.1} parent=5 // pred_region
        %s102 = ssub.s32 %s15, 1
        // Predicated region
        $region13: #{tpu_custom_call.1} parent=11 // pred_check
          %p103 = pneg %p62
        $region14: #{tpu_custom_call.1} parent=11 // pred_check_branch
          %105 = sbr.rel (%p103) target = $region16
        $region15: #{tpu_custom_call.1} parent=11 // pred_region
          %s107 = ssub.s32 256, 256
          %108 = vsyncadd [#allocation6], %s107
          %s109 = sshll.u32 [#allocation5], 4
          %s110 = int_to_ptr.vmem [resolvable:$true] %s109
          %115 = dma.hbm_to_vmem [thread:$0]  %s1, 256, %s110, [#allocation6], 128, 128, 8
        $region16: #{tpu_custom_call.1} parent=11 // pred_fallthru
          _
      $region12: #{tpu_custom_call.1} parent=5 // pred_fallthru
        _
      %p116 = scmp.lt.s32.totalorder %s15, 2
      // Predicated region
      $region17: #{tpu_custom_call.1} parent=5 // pred_check
        %p117 = pneg %p116
      $region18: #{tpu_custom_call.1} parent=5 // pred_check_branch
        %119 = sbr.rel (%p117) target = $region20
      $region19: #{tpu_custom_call.1} parent=5 // pred_region
        // Predicated region
        $region21: #{tpu_custom_call.1} parent=19 // pred_check
          %p120 = pneg %p35
        $region22: #{tpu_custom_call.1} parent=19 // pred_check_branch
          %122 = sbr.rel (%p120) target = $region24
        $region23: #{tpu_custom_call.1} parent=19 // pred_region
          %s123 = sand.u32 %s25, 1
          %s124 = scalar_lea.sflag [#allocation3], %s123
          %s125 = sand.u32 %s25, 1
          %s126 = smul.addr %s125, 8
          %s127 = scalar_lea.vmem [#allocation2], %s126
          %s129 = ssub.s32 128, 128
          %130 = vsyncadd %s124, %s129
          %s131 = smul.addr %s15, 128
          %s132 = scalar_lea.hbm %s0, %s131
          %s134 = sshll.u32 %s127, 4
          %s135 = int_to_ptr.vmem [resolvable:$true] %s134
          %137 = dma.hbm_to_vmem [thread:$0]  %s132, 128, %s135, %s124
        $region24: #{tpu_custom_call.1} parent=19 // pred_fallthru
          _
      $region20: #{tpu_custom_call.1} parent=5 // pred_fallthru
        _
      %p138 = scmp.le.s32.totalorder 1, %s15
      %p139 = scmp.lt.s32.totalorder %s15, 3
      %p140 = pnand %p138, %p139
      %p141 = pneg %p140
      // Predicated region
      $region25: #{tpu_custom_call.1} parent=5 // pred_check
        _
      $region26: #{tpu_custom_call.1} parent=5 // pred_check_branch
        %143 = sbr.rel (%p140) target = $region28
      $region27: #{tpu_custom_call.1} parent=5 // pred_region
        %s144 = ssub.s32 %s15, 1
        %s145 = sand.u32 %s28, 1
        %s146 = scalar_lea.sflag [#allocation3], %s145
        %s147 = sand.u32 %s28, 1
        %s148 = smul.addr %s147, 8
        %s149 = scalar_lea.vmem [#allocation2], %s148
        // Predicated region
        $region29: #{tpu_custom_call.1} parent=27 // pred_check
          %p150 = pneg %p41
        $region30: #{tpu_custom_call.1} parent=27 // pred_check_branch
          %152 = sbr.rel (%p150) target = $region32
        $region31: #{tpu_custom_call.1} parent=27 // pred_region
          %153 = dma.done %s146, 128
        $region32: #{tpu_custom_call.1} parent=27 // pred_fallthru
          _
        // Predicated region
        $region33: #{tpu_custom_call.1} parent=27 // pred_check
          %p154 = pneg %p62
        $region34: #{tpu_custom_call.1} parent=27 // pred_check_branch
          %156 = sbr.rel (%p154) target = $region36
        $region35: #{tpu_custom_call.1} parent=27 // pred_region
          %157 = dma.done [#allocation6], 256
        $region36: #{tpu_custom_call.1} parent=27 // pred_fallthru
          _
        %s158 = sand.u32 %s28, 1
        %s159 = scalar_lea.sflag [#allocation3], %s158
        %s160 = sand.u32 %s28, 1
        %s161 = smul.addr %s160, 8
        %s162 = scalar_lea.vmem [#allocation2], %s161
        %p163 = pneg %p41
        %p164 = pneg %p38
        %p165 = pneg %p62
        %p166 = pneg %p59
        %p167 = pneg %p88
        %p168 = pneg %p85
        %s169 = sand.u32 %s75, 1
        %s170 = scalar_lea.sflag [#allocation4], %s169
        %s171 = sand.u32 %s75, 1
        %s172 = smul.addr %s171, 8
        %s173 = scalar_lea.vmem [#allocation7], %s172
        %v174 = vld [vmem:[%s149] sm:$0xff]
        %175 = vadd.xlane.f32.xlu0 %v174
        %v176 = vpop.xlane.xlu0 %175
        %v177 = vrot.slane %v176, 4
        %v178 = vadd.f32 %v176, %v177
        %v179 = vrot.slane %v178, 2
        %v180 = vadd.f32 %v178, %v179
        %v181 = vrot.slane %v180, 1
        %v182 = vadd.f32 %v180, %v181
        %v183 = vmul.f32 %v182, 0.0009765625
        %v184 = vsub.f32 %v174, %v183
        %v185 = vmul.f32 %v184, %v184
        %186 = vadd.xlane.f32.xlu0 %v185
        %v187 = vpop.xlane.xlu0 %186
        %v188 = vrot.slane %v187, 4
        %v189 = vadd.f32 %v187, %v188
        %v190 = vrot.slane %v189, 2
        %v191 = vadd.f32 %v189, %v190
        %v192 = vrot.slane %v191, 1
        %v193 = vadd.f32 %v191, %v192
        %v194 = vmul.f32 %v193, 0.0009775171
        %v195 = vmax.f32 %v194, 0.0
        %v196 = vrsqrt.pop %v195
        %v197 = vmul.f32 %v195, %v196
        %vm198 = vcmp.eq.f32.partialorder %v195, inf
        %v199 = vsel %vm198, %v195, %v197
        %vm200 = vcmp.eq.f32.partialorder %v195, 0.0
        %v201 = vand.u32 %v195, 2147483648
        %v202 = vsel %vm200, %v201, %v199
        %v203 = vadd.f32 %v202, 1e-05
        %v204 = vrcp.pop %v203
        %v205 = vmul.f32 1.0, %v204
        %v206 = vld [vmem:[#allocation5] sm:$0xff]
        %s207 = scalar_lea.vmem [#allocation5], 8
        %v208 = vld [vmem:[%s207] sm:$0xff]
        %v209 = vmul.f32 %v184, %v205
        %v210 = vmul.f32 %v209, %v206
        %v211 = vadd.f32 %v210, %v208
        %212 = vst [vmem:[%s173] sm:$0xff] %v211
        %s213 = sand.u32 %s75, 1
        %s214 = scalar_lea.sflag [#allocation4], %s213
        %s215 = sand.u32 %s75, 1
        %s216 = smul.addr %s215, 8
        %s217 = scalar_lea.vmem [#allocation7], %s216
        // Predicated region
        $region37: #{tpu_custom_call.1} parent=27 // pred_check
          %p218 = pneg %p85
        $region38: #{tpu_custom_call.1} parent=27 // pred_check_branch
          %220 = sbr.rel (%p218) target = $region40
        $region39: #{tpu_custom_call.1} parent=27 // pred_region
          %s222 = ssub.s32 128, 128
          %223 = vsyncadd %s214, %s222
          %s224 = smul.addr %s20, 128
          %s225 = scalar_lea.hbm %s2, %s224
          %s227 = sshll.u32 %s217, 4
          %s228 = int_to_ptr.vmem [resolvable:$true] %s227
          %230 = dma.vmem_to_hbm [thread:$0]  %s228, 128, %s225, %s214
        $region40: #{tpu_custom_call.1} parent=27 // pred_fallthru
          _
      $region28: #{tpu_custom_call.1} parent=5 // pred_fallthru
        _
      %p231 = scmp.le.s32.totalorder 2, %s15
      // Predicated region
      $region41: #{tpu_custom_call.1} parent=5 // pred_check
        %p232 = pneg %p231
      $region42: #{tpu_custom_call.1} parent=5 // pred_check_branch
        %234 = sbr.rel (%p232) target = $region44
      $region43: #{tpu_custom_call.1} parent=5 // pred_region
        %s235 = ssub.s32 %s15, 2
        // Predicated region
        $region45: #{tpu_custom_call.1} parent=43 // pred_check
          %p236 = pneg %p91
        $region46: #{tpu_custom_call.1} parent=43 // pred_check_branch
          %238 = sbr.rel (%p236) target = $region48
        $region47: #{tpu_custom_call.1} parent=43 // pred_region
          %s239 = sand.u32 %s76, 1
          %s240 = scalar_lea.sflag [#allocation4], %s239
          %s241 = sand.u32 %s76, 1
          %s242 = smul.addr %s241, 8
          %s243 = scalar_lea.vmem [#allocation7], %s242
          %244 = dma.done %s240, 128
        $region48: #{tpu_custom_call.1} parent=43 // pred_fallthru
          _
      $region44: #{tpu_custom_call.1} parent=5 // pred_fallthru
        _
    $region6: #{tpu_custom_call.1} parent=1 // loop_footer
      %s19 = sadd.s32 1, %s15
    $region7: #{tpu_custom_call.1} parent=1 // loop_footer_branch
      %14 = sbr.rel target = $region3
    $region8: #{tpu_custom_call.1} parent=1 // loop_exit
      _
    %245 = vsyncpa [#allocation3], 1
    %s246 = scalar_lea.sflag [#allocation3], 1
    %247 = vsyncpa %s246, 1
    %248 = vsyncpa [#allocation6], 1
    %249 = vsyncpa [#allocation4], 1
    %s250 = scalar_lea.sflag [#allocation4], 1
    %251 = vsyncpa %s250, 1

</llo_original>
